<compile_context>
chip_gen: v7x
topology: tpu7x:2x2x1
jax: 0.10.0
libtpu: 0.0.40
codegen_flags: <defaults>
</compile_context>

<pallas_src>
import jax
import jax.numpy as jnp
from jax.experimental import pallas as pl
from jax.experimental.pallas import tpu as pltpu


def _copy_kernel(x_ref, y_ref):
    # Pure pass-through of one (bB, bD) tile.
    y_ref[...] = x_ref[...]


def _choose_tiles(B, D, itemsize, target_bytes=4 << 20):
    """Pick (row_tile, col_tile) for the flattened (B, D) slab.

    - row tile: multiple of the dtype's sublane packing (8 f32 / 16 bf16 /
      32 int8), or the full B when B is small.
    - col tile: full D when it fits the budget, otherwise a multiple of 128
      (keeps stores lane-dense / unmasked) so VMEM stays bounded for large D.
    """
    sub = max(1, 32 // itemsize)  # rows per packed sublane group

    # --- column tile --------------------------------------------------------
    max_cols = max(128, target_bytes // (sub * itemsize))
    if D <= max_cols or D < 128:
        bD = D  # full last dim (also covers odd / non-128-multiple D)
    else:
        bD = (max_cols // 128) * 128

    # --- row tile ------------------------------------------------------------
    rows = max(1, target_bytes // max(1, bD * itemsize))
    rows = min(rows, B)
    if B >= sub:
        rows = max(sub, (rows // sub) * sub)
    else:
        rows = B
    return rows, bD


def _identity_copy(x, *, donate=False):
    """Tiled, pipelined HBM->HBM copy of x via Pallas (x is left unchanged)."""
    B = x.shape[0] if x.ndim > 0 else 1
    D = 1
    for s in x.shape[1:]:
        D *= s
    x_flat = x.reshape(B, D)
    itemsize = x_flat.dtype.itemsize

    bB, bD = _choose_tiles(B, D, itemsize)
    grid = (pl.cdiv(B, bB), pl.cdiv(D, bD))

    y_flat = pl.pallas_call(
        _copy_kernel,
        grid=grid,
        in_specs=[pl.BlockSpec((bB, bD), lambda i, j: (i, j))],
        out_specs=pl.BlockSpec((bB, bD), lambda i, j: (i, j)),
        out_shape=jax.ShapeDtypeStruct((B, D), x_flat.dtype),
        input_output_aliases=({0: 0} if donate else {}),
        compiler_params=pltpu.CompilerParams(
            dimension_semantics=("parallel", "parallel"),
            vmem_limit_bytes=32 << 20,
        ),
        cost_estimate=pl.CostEstimate(
            flops=0,
            transcendentals=0,
            bytes_accessed=2 * B * D * itemsize,
        ),
    )(x_flat)
    return y_flat.reshape(x.shape)


def identity_flow_forward(x, log_df_dz, *, force_kernel=False, donate=False):
    """Pallas equivalent of Identity.forward(x, log_df_dz).

    Default: the identity is free -- return the inputs untouched (no kernel,
    no HBM traffic).  Set force_kernel=True to materialize x through the
    tiled copy kernel (e.g. when a fresh buffer is explicitly required);
    log_df_dz is always passed through unchanged and never tiled.
    """
    if not force_kernel:
        return x, log_df_dz
    # TODO(synk): for true in-place reuse pair donate=True with
    # jax.jit(..., donate_argnums=(0,)) at the call site.
    y = _identity_copy(x, donate=donate)
    return y, log_df_dz


if __name__ == "__main__":
    key = jax.random.PRNGKey(0)
    kx, kl = jax.random.split(key)

    B, C, H, W = 2, 4, 16, 16  # NCHW, flattened D = 1024 (lane-dense)
    x = jax.random.normal(kx, (B, C, H, W), dtype=jnp.float32)
    log_df_dz = jax.random.normal(kl, (B,), dtype=jnp.float32)

    # Fast path (no kernel): the recommended way to run an identity flow.
    y_fast, ld_fast = identity_flow_forward(x, log_df_dz)
    jax.block_until_ready((y_fast, ld_fast))
    assert jnp.array_equal(y_fast, x) and jnp.array_equal(ld_fast, log_df_dz)

    # Kernel path: exercises the tiled Pallas copy once.
    y, logdet = identity_flow_forward(x, log_df_dz, force_kernel=True)
    jax.block_until_ready((y, logdet))

    assert y.shape == x.shape and y.dtype == x.dtype
    assert logdet.shape == log_df_dz.shape and logdet.dtype == log_df_dz.dtype
    assert jnp.array_equal(y, x), "identity x mismatch"
    assert jnp.array_equal(logdet, log_df_dz), "identity log_df_dz mismatch"

    print("KERNEL_OK")
</pallas_src>

<mosaic_0001>
module attributes {stable_mosaic.version = 11 : i64} {
  func.func @_copy_kernel(%arg0: i32, %arg1: i32, %arg2: memref<2x1024xf32, #tpu.memory_space<vmem>>, %arg3: memref<2x1024xf32, #tpu.memory_space<vmem>>) attributes {dimension_semantics = [#tpu.dimension_semantics<parallel>, #tpu.dimension_semantics<parallel>], iteration_bounds = array<i64: 1, 1>, scalar_prefetch = 0 : i64, scratch_operands = 0 : i64, tpu.core_type = #tpu.core_type<tc>, window_params = [{transform_indices = @transform_0, window_bounds = array<i64: 2, 1024>}, {transform_indices = @transform_1, window_bounds = array<i64: 2, 1024>}]} {
    %c0 = arith.constant 0 : index
    %c0_0 = arith.constant 0 : index
    %0 = vector.load %arg2[%c0, %c0_0] : memref<2x1024xf32, #tpu.memory_space<vmem>>, vector<2x1024xf32>
    %c0_1 = arith.constant 0 : index
    %c0_2 = arith.constant 0 : index
    %1 = vector.load %arg3[%c0_1, %c0_2] : memref<2x1024xf32, #tpu.memory_space<vmem>>, vector<2x1024xf32>
    tpu.vector_store %arg3[%c0_1, %c0_2], %0 {strides = array<i32>} : memref<2x1024xf32, #tpu.memory_space<vmem>>, vector<2x1024xf32>,
    return
  }
  func.func @transform_0(%arg0: i32, %arg1: i32) -> (i32, i32) {
    %c0_i32 = arith.constant 0 : i32
    return %arg0, %arg1 : i32, i32
  }
  func.func @transform_1(%arg0: i32, %arg1: i32) -> (i32, i32) {
    %c0_i32 = arith.constant 0 : i32
    return %arg0, %arg1 : i32, i32
  }
}

</mosaic_0001>

<llo_original>
// kernel: tpu_custom_call.1
$region0: #{tpu_custom_call.1}
  #allocation0 [shape = 'u32[]', space=smem, size = 0x4, offset = 0x4, fixed_abs, tag = 'smem constant byte address 0x4 - core index']
  #allocation1 [shape = 'u32[144,128]{1,0:T(1,128)}', space=vmem, size = 0x12000, scoped, tag = 'internal scratch']
  %s0 = inlined_call_operand.hbm [shape: f32[2,1024], index: 0, kind: input, shape index: {}]
  %s1 = inlined_call_operand.hbm [shape: f32[2,1024], index: 1, kind: output, shape index: {}]
  %s2 = sld [smem:[#allocation0]]
  $region18: #{tpu_custom_call.1} parent=0
    _
  %s4 = ssub.s32 1, %s2
  %s5 = scalar_select 0, %s4, %s2
  $region1: #{tpu_custom_call.1} parent=0
    #allocation2 [shape = 'u8[8192]{0}', space=vmem, size = 0x2000, scoped, tag = 'input window, operand 0, single buffered']
    #allocation3 [shape = 's32[1]{0}', space=sflag, size = 0x4, scoped, tag = 'scoped memory for tpu_custom_call.1']
    #allocation4 [shape = 's32[1]{0}', space=sflag, size = 0x4, scoped, tag = 'scoped memory for tpu_custom_call.1']
    #allocation5 [shape = 'u8[8192]{0}', space=vmem, size = 0x2000, scoped, tag = 'output window, operand 0, single buffered']
    %6 = vsyncpa [#allocation3], 0
    %7 = vsyncpa [#allocation4], 0
    // Predicated region
    $region2: #{tpu_custom_call.1} parent=1 // pred_check
      _
    $region3: #{tpu_custom_call.1} parent=1 // pred_check_branch
      %9 = sbr.rel (0) target = $region5
    $region4: #{tpu_custom_call.1} parent=1 // pred_region
      %s11 = ssub.s32 256, 256
      %12 = vsyncadd [#allocation3], %s11
      %s14 = sshll.u32 [#allocation2], 4
      %s15 = int_to_ptr.vmem [resolvable:$true] %s14
      %17 = dma.hbm_to_vmem [thread:$0]  %s0, 256, %s15, [#allocation3]
    $region5: #{tpu_custom_call.1} parent=1 // pred_fallthru
      _
    // Predicated region
    $region6: #{tpu_custom_call.1} parent=1 // pred_check
      _
    $region7: #{tpu_custom_call.1} parent=1 // pred_check_branch
      %19 = sbr.rel (0) target = $region9
    $region8: #{tpu_custom_call.1} parent=1 // pred_region
      %20 = dma.done [#allocation3], 256
    $region9: #{tpu_custom_call.1} parent=1 // pred_fallthru
      _
    %v21 = vld [vmem:[#allocation2] sm:$0xff]
    %v22 = vld [vmem:[#allocation2 + $0x8] sm:$0xff]
    %23 = vst [vmem:[#allocation5] sm:$0xff] %v21
    %24 = vst [vmem:[#allocation5 + $0x8] sm:$0xff] %v22
    // Predicated region
    $region10: #{tpu_custom_call.1} parent=1 // pred_check
      _
    $region11: #{tpu_custom_call.1} parent=1 // pred_check_branch
      %26 = sbr.rel (0) target = $region13
    $region12: #{tpu_custom_call.1} parent=1 // pred_region
      %s28 = ssub.s32 256, 256
      %29 = vsyncadd [#allocation4], %s28
      %s31 = sshll.u32 [#allocation5], 4
      %s32 = int_to_ptr.vmem [resolvable:$true] %s31
      %34 = dma.vmem_to_hbm [thread:$0]  %s32, 256, %s1, [#allocation4]
    $region13: #{tpu_custom_call.1} parent=1 // pred_fallthru
      _
    // Predicated region
    $region14: #{tpu_custom_call.1} parent=1 // pred_check
      _
    $region15: #{tpu_custom_call.1} parent=1 // pred_check_branch
      %36 = sbr.rel (0) target = $region17
    $region16: #{tpu_custom_call.1} parent=1 // pred_region
      %37 = dma.done [#allocation4], 256
    $region17: #{tpu_custom_call.1} parent=1 // pred_fallthru
      _
    %38 = vsyncpa [#allocation3], 1
    %39 = vsyncpa [#allocation4], 1

</llo_original>
